<compile_context>
chip_gen: v7x
topology: tpu7x:2x2x1
jax: 0.10.0
libtpu: 0.0.40
codegen_flags: <defaults>
</compile_context>

<pallas_src>
import functools

import jax
import jax.numpy as jnp
from jax.experimental import pallas as pl
from jax.experimental.pallas import tpu as pltpu


def _round_up(x, m):
    return (x + m - 1) // m * m


def _triplet_center_loss_kernel(lab_tile_ref, lab_full_ref, h_ref, centers_ref,
                                out_ref, *, margin, num_classes, batch_size,
                                tile_rows):
    h = h_ref[...]                       # (TB, D), native dtype (f32 / bf16)
    c = centers_ref[...]                 # (C, D), native dtype
    lab_tile = lab_tile_ref[...]         # (TB, 1) int32
    lab_full = lab_full_ref[...]         # (B_pad, 1) int32

    # Cross term h @ centers^T on the MXU (contraction dim K = D, f32 accum).
    g = jax.lax.dot_general(h, c, (((1,), (1,)), ((), ())),
                            preferred_element_type=jnp.float32)        # (TB, C)

    hf = h.astype(jnp.float32)
    cf = c.astype(jnp.float32)
    h_norm2 = jnp.sum(hf * hf, axis=-1, keepdims=True)                 # (TB, 1)
    # (1, C) row of squared center norms via a tiny matmul (avoids a
    # sublane<->lane transposing reshape of a (C, 1) column).
    ones_row = jnp.ones((1, cf.shape[1]), jnp.float32)
    c_norm2 = jax.lax.dot_general(ones_row, cf * cf, (((1,), (1,)), ((), ())),
                                  preferred_element_type=jnp.float32)  # (1, C)

    # ||h[i] - centers[c]||^2 in Gram form (clamped right before the sqrt).
    dist2 = h_norm2 + c_norm2 - 2.0 * g                                # (TB, C)

    class_ids = jax.lax.broadcasted_iota(jnp.int32, (tile_rows, num_classes), 1)
    own = lab_tile == class_ids                                        # (TB, C)

    # Which classes occur anywhere in the (whole) batch; padded labels are -1
    # and never match, so padding cannot create a phantom negative class.
    full_rows = lab_full.shape[0]
    full_ids = jax.lax.broadcasted_iota(jnp.int32, (full_rows, num_classes), 1)
    oh_full = (lab_full == full_ids).astype(jnp.float32)               # (B_pad, C)
    present = jnp.sum(oh_full, axis=0, keepdims=True) > 0.5            # (1, C)

    # Hardest positive: every positive j shares the anchor's center, so the
    # masked max is simply the distance to the own-class center.
    dist_ap2 = jnp.sum(jnp.where(own, dist2, 0.0), axis=-1, keepdims=True)  # (TB,1)
    # Hardest negative: min over classes present in the batch with c != label[i].
    valid_neg = jnp.logical_and(present, jnp.logical_not(own))         # (TB, C)
    dist_an2 = jnp.min(jnp.where(valid_neg, dist2, jnp.inf),
                       axis=-1, keepdims=True)                         # (TB, 1)

    # sqrt deferred to the two (TB, 1) columns (EUP work 2*TB, not TB*C).
    dist_ap = jnp.sqrt(jnp.maximum(dist_ap2, 1e-12))
    dist_an = jnp.sqrt(jnp.maximum(dist_an2, 1e-12))

    # MarginRankingLoss(dist_an, dist_ap, y=1) per row; dist_an = +inf (no valid
    # negative class) clamps to 0, matching the reference.
    hinge = jnp.maximum(dist_ap - dist_an + jnp.float32(margin), 0.0)  # (TB, 1)

    # Zero out padded rows.
    row = (pl.program_id(0) * tile_rows
           + jax.lax.broadcasted_iota(jnp.int32, (tile_rows, 1), 0))
    out_ref[...] = jnp.where(row < batch_size, hinge, 0.0)


def triplet_center_loss(h, labels, centers, margin=5.0):
    """h: (B, D) float, labels: (B,) int, centers: (C, D) float -> scalar loss."""
    B, D = h.shape
    C, D2 = centers.shape
    assert D == D2, "feat_dim mismatch"

    # Row tile: multiple of 8 (sublane), capped at 256 so per-tile VMEM stays
    # bounded independent of B and the grid pipelines / shards across cores.
    TB = min(256, _round_up(B, 8))
    B_pad = _round_up(B, TB)
    grid = (B_pad // TB,)

    labels2d = labels.reshape(B, 1).astype(jnp.int32)
    if B_pad != B:
        h = jnp.pad(h, ((0, B_pad - B), (0, 0)))
        labels2d = jnp.pad(labels2d, ((0, B_pad - B), (0, 0)),
                           constant_values=-1)

    kernel = functools.partial(_triplet_center_loss_kernel,
                               margin=float(margin), num_classes=C,
                               batch_size=B, tile_rows=TB)

    per_row_hinge = pl.pallas_call(
        kernel,
        out_shape=jax.ShapeDtypeStruct((B_pad, 1), jnp.float32),
        grid_spec=pltpu.PrefetchScalarGridSpec(
            num_scalar_prefetch=0,
            grid=grid,
            in_specs=[
                pl.BlockSpec((TB, 1), lambda i: (i, 0)),      # labels (this tile)
                pl.BlockSpec((B_pad, 1), lambda i: (0, 0)),   # labels (full, resident)
                pl.BlockSpec((TB, D), lambda i: (i, 0)),      # h (row tile)
                pl.BlockSpec((C, D), lambda i: (0, 0)),       # centers (resident)
            ],
            out_specs=pl.BlockSpec((TB, 1), lambda i: (i, 0)),
        ),
        compiler_params=pltpu.CompilerParams(
            dimension_semantics=("parallel",)),
    )(labels2d, labels2d, h, centers)

    # Padded rows contribute exactly 0; divide by the true batch size.
    return jnp.sum(per_row_hinge) / jnp.float32(B)


def _reference(h, labels, centers, margin=5.0):
    """Plain-JAX reference (original B-vs-B formulation) for sanity checking."""
    cb = centers[labels]                                     # (B, D)
    dist2 = jnp.sum((h[:, None, :] - cb[None, :, :]) ** 2, axis=-1)
    dist = jnp.sqrt(jnp.maximum(dist2, 1e-12))
    mask = labels[:, None] == labels[None, :]
    dist_ap = jnp.max(jnp.where(mask, dist, -jnp.inf), axis=1)
    dist_an = jnp.min(jnp.where(mask, jnp.inf, dist), axis=1)
    return jnp.mean(jnp.maximum(dist_ap - dist_an + margin, 0.0))


if __name__ == "__main__":
    num_classes = 4
    feat_dim = 32
    batch = 8
    margin = 5.0

    key = jax.random.PRNGKey(0)
    k_h, k_c = jax.random.split(key)
    h = jax.random.normal(k_h, (batch, feat_dim), dtype=jnp.float32)
    centers = jax.random.normal(k_c, (num_classes, feat_dim), dtype=jnp.float32)
    labels = jnp.array([0, 1, 2, 3, 0, 1, 2, 3], dtype=jnp.int32)

    loss = triplet_center_loss(h, labels, centers, margin=margin)
    loss = jax.block_until_ready(loss)

    ref = jax.block_until_ready(_reference(h, labels, centers, margin=margin))
    assert jnp.allclose(loss, ref, atol=1e-4, rtol=1e-4), (loss, ref)

    print("KERNEL_OK")
</pallas_src>

<mosaic_0001>
module attributes {stable_mosaic.version = 11 : i64} {
  func.func @_triplet_center_loss_kernel(%arg0: i32, %arg1: memref<8x1xi32, #tpu.memory_space<vmem>>, %arg2: memref<8x1xi32, #tpu.memory_space<vmem>>, %arg3: memref<8x32xf32, #tpu.memory_space<vmem>>, %arg4: memref<4x32xf32, #tpu.memory_space<vmem>>, %arg5: memref<8x1xf32, #tpu.memory_space<vmem>>) attributes {dimension_semantics = [#tpu.dimension_semantics<parallel>], iteration_bounds = array<i64: 1>, scalar_prefetch = 0 : i64, scratch_operands = 0 : i64, tpu.core_type = #tpu.core_type<tc>, window_params = [{transform_indices = @transform_0, window_bounds = array<i64: 8, 1>}, {pipeline_mode = #tpu.pipeline_mode<synchronous>, transform_indices = @transform_1, window_bounds = array<i64: 8, 1>}, {transform_indices = @transform_2, window_bounds = array<i64: 8, 32>}, {pipeline_mode = #tpu.pipeline_mode<synchronous>, transform_indices = @transform_3, window_bounds = array<i64: 4, 32>}, {transform_indices = @transform_4, window_bounds = array<i64: 8, 1>}]} {
    %c0 = arith.constant 0 : index
    %c0_0 = arith.constant 0 : index
    %0 = vector.load %arg3[%c0, %c0_0] : memref<8x32xf32, #tpu.memory_space<vmem>>, vector<8x32xf32>
    %c0_1 = arith.constant 0 : index
    %c0_2 = arith.constant 0 : index
    %1 = vector.load %arg4[%c0_1, %c0_2] : memref<4x32xf32, #tpu.memory_space<vmem>>, vector<4x32xf32>
    %c0_3 = arith.constant 0 : index
    %c0_4 = arith.constant 0 : index
    %2 = vector.load %arg1[%c0_3, %c0_4] : memref<8x1xi32, #tpu.memory_space<vmem>>, vector<8x1xi32>
    %c0_5 = arith.constant 0 : index
    %c0_6 = arith.constant 0 : index
    %3 = vector.load %arg2[%c0_5, %c0_6] : memref<8x1xi32, #tpu.memory_space<vmem>>, vector<8x1xi32>
    %cst = arith.constant dense<0.000000e+00> : vector<8x4xf32>
    %4 = tpu.matmul %0, %1, %cst {dimension_numbers = #tpu.dot_dimension_numbers<[1], [1], [0], [0], [0, 0, 1, 0], [], []>} : vector<8x32xf32>, vector<4x32xf32>, vector<8x4xf32> -> vector<8x4xf32>
    %5 = arith.mulf %0, %0 : vector<8x32xf32>
    %cst_7 = arith.constant dense<0.000000e+00> : vector<8xf32>
    %6 = vector.multi_reduction <add>, %5, %cst_7 [1] : vector<8x32xf32> to vector<8xf32>
    %7 = vector.shape_cast %6 : vector<8xf32> to vector<8x1xf32>
    %cst_8 = arith.constant 1.000000e+00 : f32
    %8 = vector.broadcast %cst_8 : f32 to vector<1x32xf32>
    %9 = arith.mulf %1, %1 : vector<4x32xf32>
    %cst_9 = arith.constant dense<0.000000e+00> : vector<1x4xf32>
    %10 = tpu.matmul %8, %9, %cst_9 {dimension_numbers = #tpu.dot_dimension_numbers<[1], [1], [0], [0], [0, 0, 1, 0], [], []>} : vector<1x32xf32>, vector<4x32xf32>, vector<1x4xf32> -> vector<1x4xf32>
    %11 = vector.broadcast %7 : vector<8x1xf32> to vector<8x4xf32>
    %12 = vector.broadcast %10 : vector<1x4xf32> to vector<8x4xf32>
    %13 = arith.addf %11, %12 : vector<8x4xf32>
    %cst_10 = arith.constant 2.000000e+00 : f32
    %14 = vector.broadcast %cst_10 : f32 to vector<8x4xf32>
    %15 = arith.mulf %14, %4 : vector<8x4xf32>
    %16 = arith.subf %13, %15 : vector<8x4xf32>
    %17 = tpu.iota {dimensions = array<i32: 1>} : vector<8x4xi32>
    %18 = vector.broadcast %2 : vector<8x1xi32> to vector<8x4xi32>
    %19 = arith.cmpi eq, %18, %17 : vector<8x4xi32>
    %20 = tpu.iota {dimensions = array<i32: 1>} : vector<8x4xi32>
    %21 = vector.broadcast %3 : vector<8x1xi32> to vector<8x4xi32>
    %22 = arith.cmpi eq, %21, %20 : vector<8x4xi32>
    %23 = arith.extui %22 : vector<8x4xi1> to vector<8x4xi32>
    %24 = arith.sitofp %23 : vector<8x4xi32> to vector<8x4xf32>
    %cst_11 = arith.constant dense<0.000000e+00> : vector<4xf32>
    %25 = vector.multi_reduction <add>, %24, %cst_11 [0] : vector<8x4xf32> to vector<4xf32>
    %26 = vector.shape_cast %25 : vector<4xf32> to vector<1x4xf32>
    %cst_12 = arith.constant 5.000000e-01 : f32
    %27 = vector.broadcast %cst_12 : f32 to vector<1x4xf32>
    %28 = arith.cmpf ogt, %26, %27 : vector<1x4xf32>
    %cst_13 = arith.constant 0.000000e+00 : f32
    %29 = vector.broadcast %cst_13 : f32 to vector<8x4xf32>
    %30 = arith.select %19, %16, %29 : vector<8x4xi1>, vector<8x4xf32>
    %cst_14 = arith.constant dense<0.000000e+00> : vector<8xf32>
    %31 = vector.multi_reduction <add>, %30, %cst_14 [1] : vector<8x4xf32> to vector<8xf32>
    %32 = vector.shape_cast %31 : vector<8xf32> to vector<8x1xf32>
    %cst_15 = arith.constant dense<true> : vector<8x4xi1>
    %33 = arith.xori %19, %cst_15 : vector<8x4xi1>
    %34 = vector.broadcast %28 : vector<1x4xi1> to vector<8x4xi1>
    %35 = arith.andi %34, %33 : vector<8x4xi1>
    %cst_16 = arith.constant 0x7F800000 : f32
    %36 = vector.broadcast %cst_16 : f32 to vector<8x4xf32>
    %37 = arith.select %35, %16, %36 : vector<8x4xi1>, vector<8x4xf32>
    %cst_17 = arith.constant dense<0x7F800000> : vector<8xf32>
    %38 = vector.multi_reduction <minimumf>, %37, %cst_17 [1] : vector<8x4xf32> to vector<8xf32>
    %39 = vector.shape_cast %38 : vector<8xf32> to vector<8x1xf32>
    %cst_18 = arith.constant 9.99999996E-13 : f32
    %40 = vector.broadcast %cst_18 : f32 to vector<8x1xf32>
    %41 = arith.maximumf %32, %40 : vector<8x1xf32>
    %42 = math.sqrt %41 : vector<8x1xf32>
    %cst_19 = arith.constant 9.99999996E-13 : f32
    %43 = vector.broadcast %cst_19 : f32 to vector<8x1xf32>
    %44 = arith.maximumf %39, %43 : vector<8x1xf32>
    %45 = math.sqrt %44 : vector<8x1xf32>
    %46 = arith.subf %42, %45 : vector<8x1xf32>
    %cst_20 = arith.constant 5.000000e+00 : f32
    %47 = vector.broadcast %cst_20 : f32 to vector<8x1xf32>
    %48 = arith.addf %46, %47 : vector<8x1xf32>
    %cst_21 = arith.constant 0.000000e+00 : f32
    %49 = vector.broadcast %cst_21 : f32 to vector<8x1xf32>
    %50 = arith.maximumf %48, %49 : vector<8x1xf32>
    %c8_i32 = arith.constant 8 : i32
    %51 = arith.muli %arg0, %c8_i32 : i32
    %52 = tpu.iota {dimensions = array<i32: 0>} : vector<8x1xi32>
    %53 = vector.broadcast %51 : i32 to vector<8x1xi32>
    %54 = arith.addi %53, %52 : vector<8x1xi32>
    %c8_i32_22 = arith.constant 8 : i32
    %55 = vector.broadcast %c8_i32_22 : i32 to vector<8x1xi32>
    %56 = arith.cmpi slt, %54, %55 : vector<8x1xi32>
    %cst_23 = arith.constant 0.000000e+00 : f32
    %57 = vector.broadcast %cst_23 : f32 to vector<8x1xf32>
    %58 = arith.select %56, %50, %57 : vector<8x1xi1>, vector<8x1xf32>
    %c0_24 = arith.constant 0 : index
    %c0_25 = arith.constant 0 : index
    %59 = vector.load %arg5[%c0_24, %c0_25] : memref<8x1xf32, #tpu.memory_space<vmem>>, vector<8x1xf32>
    tpu.vector_store %arg5[%c0_24, %c0_25], %58 {strides = array<i32>} : memref<8x1xf32, #tpu.memory_space<vmem>>, vector<8x1xf32>,
    return
  }
  func.func @transform_0(%arg0: i32) -> (i32, i32) {
    %c0_i32 = arith.constant 0 : i32
    %c0_i32_0 = arith.constant 0 : i32
    return %arg0, %c0_i32 : i32, i32
  }
  func.func @transform_1(%arg0: i32) -> (i32, i32) {
    %c0_i32 = arith.constant 0 : i32
    %c0_i32_0 = arith.constant 0 : i32
    %c0_i32_1 = arith.constant 0 : i32
    return %c0_i32, %c0_i32_0 : i32, i32
  }
  func.func @transform_2(%arg0: i32) -> (i32, i32) {
    %c0_i32 = arith.constant 0 : i32
    %c0_i32_0 = arith.constant 0 : i32
    return %arg0, %c0_i32 : i32, i32
  }
  func.func @transform_3(%arg0: i32) -> (i32, i32) {
    %c0_i32 = arith.constant 0 : i32
    %c0_i32_0 = arith.constant 0 : i32
    %c0_i32_1 = arith.constant 0 : i32
    return %c0_i32, %c0_i32_0 : i32, i32
  }
  func.func @transform_4(%arg0: i32) -> (i32, i32) {
    %c0_i32 = arith.constant 0 : i32
    %c0_i32_0 = arith.constant 0 : i32
    return %arg0, %c0_i32 : i32, i32
  }
}

</mosaic_0001>

<llo_original>
// kernel: tpu_custom_call.1
$region0: #{tpu_custom_call.1}
  #allocation0 [shape = 'u32[]', space=smem, size = 0x4, offset = 0x4, fixed_abs, tag = 'smem constant byte address 0x4 - core index']
  #allocation1 [shape = 'u32[144,128]{1,0:T(1,128)}', space=vmem, size = 0x12000, scoped, tag = 'internal scratch']
  %s0 = inlined_call_operand.vmem [shape: s32[8,1], index: 0, kind: input, shape index: {}]
  %s1 = inlined_call_operand.vmem [shape: s32[8,1], index: 1, kind: input, shape index: {}]
  %s2 = inlined_call_operand.vmem [shape: f32[8,32], index: 2, kind: input, shape index: {}]
  %s3 = inlined_call_operand.vmem [shape: f32[4,32], index: 3, kind: input, shape index: {}]
  %s4 = inlined_call_operand.vmem [shape: f32[8,1], index: 4, kind: output, shape index: {}]
  %s5 = sld [smem:[#allocation0]]
  $region26: #{tpu_custom_call.1} parent=0
    _
  %s7 = ssub.s32 1, %s5
  %s8 = scalar_select 0, %s7, %s5
  // Predicated region
  $region2: #{tpu_custom_call.1} parent=0 // pred_check
    _
  $region3: #{tpu_custom_call.1} parent=0 // pred_check_branch
    %10 = sbr.rel (0) target = $region5
  $region4: #{tpu_custom_call.1} parent=0 // pred_region
    _
  $region5: #{tpu_custom_call.1} parent=0 // pred_fallthru
    _
  // Predicated region
  $region6: #{tpu_custom_call.1} parent=0 // pred_check
    _
  $region7: #{tpu_custom_call.1} parent=0 // pred_check_branch
    %12 = sbr.rel (0) target = $region9
  $region8: #{tpu_custom_call.1} parent=0 // pred_region
    _
  $region9: #{tpu_custom_call.1} parent=0 // pred_fallthru
    _
  // Predicated region
  $region10: #{tpu_custom_call.1} parent=0 // pred_check
    _
  $region11: #{tpu_custom_call.1} parent=0 // pred_check_branch
    %14 = sbr.rel (0) target = $region13
  $region12: #{tpu_custom_call.1} parent=0 // pred_region
    _
  $region13: #{tpu_custom_call.1} parent=0 // pred_fallthru
    _
  // Predicated region
  $region14: #{tpu_custom_call.1} parent=0 // pred_check
    _
  $region15: #{tpu_custom_call.1} parent=0 // pred_check_branch
    %16 = sbr.rel (0) target = $region17
  $region16: #{tpu_custom_call.1} parent=0 // pred_region
    _
  $region17: #{tpu_custom_call.1} parent=0 // pred_fallthru
    _
  %v17 = vld [vmem:[%s2] sm:$0xff]
  %v18 = vld [vmem:[%s3] sm:$0xf]
  %v19 = vld [vmem:[%s0] sm:$0xff]
  %v20 = vld [vmem:[%s1] sm:$0xff]
  %vm21 = vcmask 261120
  %v23 = vsel %vm21, %v17, 0
  %v26 = vsel %vm21, %v18, 0
  %28 = vmatprep.subr.mxu0 0.0
  %29 = vmatpush1.xpose.msra.mxu0 %v26
  %30 = vmatprep.subr.mxu0 0.0
  %31 = vmatpush1.xpose.msra.mxu0 0.0
  %32 = vmatprep.subr.mxu0 0.0
  %33 = vmatpush1.xpose.msra.mxu0 0.0
  %34 = vmatprep.subr.mxu0 0.0
  %35 = vmatpush1.xpose.msra.mxu0 0.0
  %36 = vmatprep.subr.mxu0 0.0
  %37 = vmatpush1.xpose.msra.mxu0 0.0
  %38 = vmatprep.subr.mxu0 0.0
  %39 = vmatpush1.xpose.msra.mxu0 0.0
  %40 = vmatprep.subr.mxu0 0.0
  %41 = vmatpush1.xpose.msra.mxu0 0.0
  %42 = vmatprep.subr.mxu0 0.0
  %43 = vmatpush1.xpose.msra.mxu0 0.0
  %44 = vmatprep.subr.mxu0 0.0
  %45 = vmatpush1.xpose.msra.mxu0 0.0
  %46 = vmatprep.subr.mxu0 0.0
  %47 = vmatpush1.xpose.msra.mxu0 0.0
  %48 = vmatprep.subr.mxu0 0.0
  %49 = vmatpush1.xpose.msra.mxu0 0.0
  %50 = vmatprep.subr.mxu0 0.0
  %51 = vmatpush1.xpose.msra.mxu0 0.0
  %52 = vmatprep.subr.mxu0 0.0
  %53 = vmatpush1.xpose.msra.mxu0 0.0
  %54 = vmatprep.subr.mxu0 0.0
  %55 = vmatpush1.xpose.msra.mxu0 0.0
  %56 = vmatprep.subr.mxu0 0.0
  %57 = vmatpush1.xpose.msra.mxu0 0.0
  %58 = vmatprep.subr.mxu0 0.0
  %59 = vmatpush1.xpose.msra.mxu0 0.0
  %60 = vmatprep.subr.mxu0 0.0
  %61 = vmatpush1.xpose.msra.mxu0 0.0
  %62 = vmatprep.subr.mxu0 0.0
  %63 = vmatpush1.xpose.msra.mxu0 0.0
  %64 = vmatprep.subr.mxu0 0.0
  %65 = vmatpush1.xpose.msra.mxu0 0.0
  %66 = vmatprep.subr.mxu0 0.0
  %67 = vmatpush1.xpose.msra.mxu0 0.0
  %68 = vmatprep.subr.mxu0 0.0
  %69 = vmatpush1.xpose.msra.mxu0 0.0
  %70 = vmatprep.subr.mxu0 0.0
  %71 = vmatpush1.xpose.msra.mxu0 0.0
  %72 = vmatprep.subr.mxu0 0.0
  %73 = vmatpush1.xpose.msra.mxu0 0.0
  %74 = vmatprep.subr.mxu0 0.0
  %75 = vmatpush1.xpose.msra.mxu0 0.0
  %76 = vmatprep.subr.mxu0 0.0
  %77 = vmatpush1.xpose.msra.mxu0 0.0
  %78 = vmatprep.subr.mxu0 0.0
  %79 = vmatpush1.xpose.msra.mxu0 0.0
  %80 = vmatprep.subr.mxu0 0.0
  %81 = vmatpush1.xpose.msra.mxu0 0.0
  %82 = vmatprep.subr.mxu0 0.0
  %83 = vmatpush1.xpose.msra.mxu0 0.0
  %84 = vmatprep.subr.mxu0 0.0
  %85 = vmatpush1.xpose.msra.mxu0 0.0
  %86 = vmatprep.subr.mxu0 0.0
  %87 = vmatpush1.xpose.msra.mxu0 0.0
  %88 = vmatprep.subr.mxu0 0.0
  %89 = vmatpush1.xpose.msra.mxu0 0.0
  %90 = vmatprep.subr.mxu0 0.0
  %91 = vmatpush1.xpose.msra.mxu0 0.0
  %92 = vmatprep.mubr.f32.mxu0 0.0
  %93 = vmatmul.mubr.f32.gmra.mrb[0].mxu0 %v23
  %v94 = vpop.f32.mrb[0].mxu0
  %v95 = vadd.f32 0.0, %v94
  %v96 = vpop.f32.mrb[0].mxu0
  %97 = vdwg.mxu0
  %v98 = vmul.f32 %v17, %v17
  %v99 = vsel %vm21, %v98, 0.0
  %100 = vadd.xlane.f32.xlu0 %v99
  %v101 = vpop.xlane.xlu0 %100
  %v102 = vmul.f32 %v18, %v18
  %v104 = vsel %vm21, 1.0, 0
  %v107 = vsel %vm21, %v102, 0
  %109 = vmatprep.subr.mxu0 0.0
  %110 = vmatpush1.xpose.msra.mxu0 %v107
  %111 = vmatprep.subr.mxu0 0.0
  %112 = vmatpush1.xpose.msra.mxu0 0.0
  %113 = vmatprep.subr.mxu0 0.0
  %114 = vmatpush1.xpose.msra.mxu0 0.0
  %115 = vmatprep.subr.mxu0 0.0
  %116 = vmatpush1.xpose.msra.mxu0 0.0
  %117 = vmatprep.subr.mxu0 0.0
  %118 = vmatpush1.xpose.msra.mxu0 0.0
  %119 = vmatprep.subr.mxu0 0.0
  %120 = vmatpush1.xpose.msra.mxu0 0.0
  %121 = vmatprep.subr.mxu0 0.0
  %122 = vmatpush1.xpose.msra.mxu0 0.0
  %123 = vmatprep.subr.mxu0 0.0
  %124 = vmatpush1.xpose.msra.mxu0 0.0
  %125 = vmatprep.subr.mxu0 0.0
  %126 = vmatpush1.xpose.msra.mxu0 0.0
  %127 = vmatprep.subr.mxu0 0.0
  %128 = vmatpush1.xpose.msra.mxu0 0.0
  %129 = vmatprep.subr.mxu0 0.0
  %130 = vmatpush1.xpose.msra.mxu0 0.0
  %131 = vmatprep.subr.mxu0 0.0
  %132 = vmatpush1.xpose.msra.mxu0 0.0
  %133 = vmatprep.subr.mxu0 0.0
  %134 = vmatpush1.xpose.msra.mxu0 0.0
  %135 = vmatprep.subr.mxu0 0.0
  %136 = vmatpush1.xpose.msra.mxu0 0.0
  %137 = vmatprep.subr.mxu0 0.0
  %138 = vmatpush1.xpose.msra.mxu0 0.0
  %139 = vmatprep.subr.mxu0 0.0
  %140 = vmatpush1.xpose.msra.mxu0 0.0
  %141 = vmatprep.subr.mxu0 0.0
  %142 = vmatpush1.xpose.msra.mxu0 0.0
  %143 = vmatprep.subr.mxu0 0.0
  %144 = vmatpush1.xpose.msra.mxu0 0.0
  %145 = vmatprep.subr.mxu0 0.0
  %146 = vmatpush1.xpose.msra.mxu0 0.0
  %147 = vmatprep.subr.mxu0 0.0
  %148 = vmatpush1.xpose.msra.mxu0 0.0
  %149 = vmatprep.subr.mxu0 0.0
  %150 = vmatpush1.xpose.msra.mxu0 0.0
  %151 = vmatprep.subr.mxu0 0.0
  %152 = vmatpush1.xpose.msra.mxu0 0.0
  %153 = vmatprep.subr.mxu0 0.0
  %154 = vmatpush1.xpose.msra.mxu0 0.0
  %155 = vmatprep.subr.mxu0 0.0
  %156 = vmatpush1.xpose.msra.mxu0 0.0
  %157 = vmatprep.subr.mxu0 0.0
  %158 = vmatpush1.xpose.msra.mxu0 0.0
  %159 = vmatprep.subr.mxu0 0.0
  %160 = vmatpush1.xpose.msra.mxu0 0.0
  %161 = vmatprep.subr.mxu0 0.0
  %162 = vmatpush1.xpose.msra.mxu0 0.0
  %163 = vmatprep.subr.mxu0 0.0
  %164 = vmatpush1.xpose.msra.mxu0 0.0
  %165 = vmatprep.subr.mxu0 0.0
  %166 = vmatpush1.xpose.msra.mxu0 0.0
  %167 = vmatprep.subr.mxu0 0.0
  %168 = vmatpush1.xpose.msra.mxu0 0.0
  %169 = vmatprep.subr.mxu0 0.0
  %170 = vmatpush1.xpose.msra.mxu0 0.0
  %171 = vmatprep.subr.mxu0 0.0
  %172 = vmatpush1.xpose.msra.mxu0 0.0
  %173 = vmatprep.mubr.f32.mxu0 0.0
  %174 = vmatmul.mubr.f32.gmra.mrb[0].mxu0 %v104
  %v175 = vpop.f32.mrb[0].mxu0
  %v176 = vadd.f32 0.0, %v175
  %v177 = vpop.f32.mrb[0].mxu0
  %178 = vdwg.mxu0
  %v179 = vlaneseq
  %v180 = vshrl.u32 %v179, 7
  %v181 = vsub.s32 0, %v180
  %v182 = vrot.slane %v176, %v181
  %v183 = vadd.f32 %v101, %v182
  %v184 = vmul.f32 %v95, 2.0
  %v185 = vsub.f32 %v183, %v184
  %v186 = vlaneseq
  %v187 = vand.u32 %v186, 127
  %188 = vset.pattern.permute.xlu0 0
  %189 = vperm.xlu0 %188, %v19
  %v190 = vpop.permute.xlu0 %189
  %vm191 = vcmp.eq.s32.totalorder %v190, %v187
  %192 = vset.pattern.permute.xlu0 0
  %193 = vperm.xlu0 %192, %v20
  %v194 = vpop.permute.xlu0 %193
  %vm195 = vcmp.eq.s32.totalorder %v194, %v187
  %v196 = vsel %vm195, 1, 0
  %v197 = vcvt.s32.f32 %v196
  %vm198 = vcmask 31744
  %v199 = vsel %vm198, %v197, 0.0
  %v200 = vrot.slane %v199, 4
  %v201 = vadd.f32 %v199, %v200
  %v202 = vrot.slane %v201, 2
  %v203 = vadd.f32 %v201, %v202
  %v204 = vrot.slane %v203, 1
  %v205 = vadd.f32 %v203, %v204
  %vm206 = vcmp.gt.f32.partialorder %v205, 0.5
  %v207 = vsel %vm191, %v185, 0.0
  %v208 = vsel %vm198, %v207, 0.0
  %209 = vadd.xlane.f32.xlu0 %v208
  %v210 = vpop.xlane.xlu0 %209
  %vm211 = vmxor %vm191, 1
  %v212 = vsel %vm206, 1, 0
  %vm213 = vcmp.eq.s32.totalorder %v212, 1
  %vm214 = vmand %vm213, %vm211
  %v215 = vsel %vm214, %v185, inf
  %v216 = vsel %vm198, %v215, inf
  %217 = vmin.xlane.f32.xlu0 %v216
  %v218 = vpop.xlane.xlu0 %217
  %v219 = vmax.f32 %v210, 1e-12
  %v220 = vrsqrt.pop %v219
  %v221 = vmul.f32 %v219, %v220
  %vm222 = vcmp.eq.f32.partialorder %v219, inf
  %v223 = vsel %vm222, %v219, %v221
  %vm224 = vcmp.eq.f32.partialorder %v219, 0.0
  %v225 = vand.u32 %v219, 2147483648
  %v226 = vsel %vm224, %v225, %v223
  %v227 = vmax.f32 %v218, 1e-12
  %v228 = vrsqrt.pop %v227
  %v229 = vmul.f32 %v227, %v228
  %vm230 = vcmp.eq.f32.partialorder %v227, inf
  %v231 = vsel %vm230, %v227, %v229
  %vm232 = vcmp.eq.f32.partialorder %v227, 0.0
  %v233 = vand.u32 %v227, 2147483648
  %v234 = vsel %vm232, %v233, %v231
  %v235 = vsub.f32 %v226, %v234
  %v236 = vadd.f32 %v235, 5.0
  %v237 = vmax.f32 %v236, 0.0
  %s238 = smul.u32 0, 8
  %v239 = vlaneseq
  %v240 = vshrl.u32 %v239, 7
  %v241 = vstv %s238
  %v242 = vadd.s32 %v241, %v240
  %vm243 = vcmp.lt.s32.totalorder %v242, 8
  %v244 = vsel %vm243, %v237, 0.0
  %vm245 = vcmask 7168
  %246 = vst.msk [vmem:[%s4] sm:$0xff] %vm245, %v244
  // Predicated region
  $region18: #{tpu_custom_call.1} parent=0 // pred_check
    _
  $region19: #{tpu_custom_call.1} parent=0 // pred_check_branch
    %248 = sbr.rel (0) target = $region21
  $region20: #{tpu_custom_call.1} parent=0 // pred_region
    _
  $region21: #{tpu_custom_call.1} parent=0 // pred_fallthru
    _
  // Predicated region
  $region22: #{tpu_custom_call.1} parent=0 // pred_check
    _
  $region23: #{tpu_custom_call.1} parent=0 // pred_check_branch
    %250 = sbr.rel (0) target = $region25
  $region24: #{tpu_custom_call.1} parent=0 // pred_region
    _
  $region25: #{tpu_custom_call.1} parent=0 // pred_fallthru
    _

</llo_original>
